<compile_context>
chip_gen: v6e
topology: v6e:2x2x1
jax: 0.10.0
libtpu: 0.0.40
codegen_flags: <defaults>
</compile_context>

<pallas_src>
import functools
import math

import numpy as np
import jax
import jax.numpy as jnp
from jax import lax
from jax.experimental import pallas as pl
from jax.experimental.pallas import tpu as pltpu

DIM_H = 32
NUM_HEADS = 4
DIM_HEAD = DIM_H // NUM_HEADS                        # 8
NB_FEATURES = int(DIM_HEAD * math.log(DIM_HEAD))     # 16 (performer default nb_features)
HM = NUM_HEADS * NB_FEATURES                         # 64
BN_EPS = 1e-5
FAVOR_EPS = 1e-4


def _round_up(x, m):
    return ((x + m - 1) // m) * m


def _pick_tile(n_pad, max_tile):
    # n_pad is a multiple of 128; pick the largest standard tile that divides it.
    for t in (2048, 1024, 512, 256, 128):
        if t <= max_tile and n_pad % t == 0:
            return t
    return 128


def _pick_graph_block(num_graphs, max_block=8):
    # Keep >= 2 grid steps whenever possible (v7x megacore), amortize per-step overhead otherwise.
    if num_graphs <= 1:
        return 1
    return max(1, min(max_block, num_graphs // 2))


# ----------------------------- Pallas kernels -----------------------------

def _moments_kernel(x_ref, mom_ref):
    # Row-tiled per-feature [sum; sum_sq].  Padded rows of the input must be zero.
    @pl.when(pl.program_id(0) == 0)
    def _():
        mom_ref[...] = jnp.zeros_like(mom_ref)

    x = x_ref[...]
    mom_ref[...] += jnp.concatenate(
        [jnp.sum(x, axis=0, keepdims=True),
         jnp.sum(x * x, axis=0, keepdims=True)], axis=0)


def _bn_affine_matmul_kernel(x_ref, scale_ref, shift_ref, w_ref, o_ref):
    # (x * scale + shift) @ W  ->  bf16 output (consumed by the bf16 GCN aggregation).
    xn = x_ref[...] * scale_ref[...] + shift_ref[...]
    o_ref[...] = jnp.dot(xn, w_ref[...],
                         preferred_element_type=jnp.float32).astype(o_ref.dtype)


def _gcn_agg_kernel(a_ref, xw_ref, b_ref, o_ref, acc_ref):
    # Tiled aggregation: relu(A_hat @ XW + b).  A_hat/XW tiles are bf16, accumulator is f32.
    @pl.when(pl.program_id(1) == 0)
    def _():
        acc_ref[...] = jnp.zeros_like(acc_ref)

    acc_ref[...] += jnp.dot(a_ref[...], xw_ref[...],
                            preferred_element_type=jnp.float32)

    @pl.when(pl.program_id(1) == pl.num_programs(1) - 1)
    def _():
        o_ref[...] = jnp.maximum(acc_ref[...] + b_ref[...], 0.0)


def _performer_kernel(len_ref, h_ref, wqkv_ref, bqkv_ref, pbd_ref, wo_ref, bo_ref,
                      o_ref, *, gblk, nmax):
    # G graphs per grid step.  All matmuls are fused over graphs and heads; the only per-head
    # work is the VPU max used for the FAVOR+ numerical stabilizer (exactly matching
    # performer_pytorch: per-row max for queries, per-(graph, head) global max for keys).
    G, N = gblk, nmax
    D, H, DH, M = DIM_H, NUM_HEADS, DIM_HEAD, NB_FEATURES
    GN = G * N
    step = pl.program_id(0)

    data_normalizer = DIM_HEAD ** (-0.25)
    ratio = NB_FEATURES ** (-0.5)

    h2 = h_ref[...].reshape(GN, D)                                            # [GN, D]
    qkv = jnp.dot(h2, wqkv_ref[...],
                  preferred_element_type=jnp.float32) + bqkv_ref[...]         # [GN, 3D]
    q = qkv[:, :D] * data_normalizer
    k = qkv[:, D:2 * D] * data_normalizer
    v = qkv[:, 2 * D:]

    # Validity mask from per-graph node counts (scalar prefetch, SMEM) + iota.
    # Only v is masked (performer_pytorch semantics: padded keys still reach the denominator).
    iota_n = lax.broadcasted_iota(jnp.int32, (N, 1), 0)
    mask = jnp.concatenate(
        [(iota_n < len_ref[step * G + g]).astype(jnp.float32) for g in range(G)], axis=0)
    v = v * mask                                                               # [GN, D]

    # Random-feature projection for all heads at once (block-diagonal [D, H*M] weight),
    # and per-head ||.||^2/2 terms broadcast over each head's M columns via an indicator matmul.
    qd = jnp.dot(q, pbd_ref[...], preferred_element_type=jnp.float32)          # [GN, HM]
    kd = jnp.dot(k, pbd_ref[...], preferred_element_type=jnp.float32)          # [GN, HM]
    row_head = lax.broadcasted_iota(jnp.int32, (D, HM), 0) // DH
    col_head = lax.broadcasted_iota(jnp.int32, (D, HM), 1) // M
    sq = (row_head == col_head).astype(jnp.float32)                            # [D, HM]
    diag_q = 0.5 * jnp.dot(q * q, sq, preferred_element_type=jnp.float32)      # [GN, HM]
    diag_k = 0.5 * jnp.dot(k * k, sq, preferred_element_type=jnp.float32)      # [GN, HM]

    # Per-head stabilizers without lane slicing (mask other heads with a large negative).
    kd3 = kd.reshape(G, N, HM)
    head_id = lax.broadcasted_iota(jnp.int32, (1, HM), 1) // M                 # [1, HM]
    q_stab = jnp.zeros((GN, HM), jnp.float32)
    k_stab = jnp.zeros((G, 1, HM), jnp.float32)
    for hh in range(H):
        hmask = (head_id == hh).astype(jnp.float32)                            # [1, HM]
        neg = (1.0 - hmask) * (-1e30)
        q_stab = q_stab + jnp.max(qd + neg, axis=-1, keepdims=True) * hmask    # [GN, HM]
        kmax_rows = jnp.max(kd + neg, axis=-1, keepdims=True)                  # [GN, 1]
        kmax_g = jnp.max(kmax_rows.reshape(G, N, 1), axis=1, keepdims=True)    # [G, 1, 1]
        k_stab = k_stab + kmax_g * hmask                                       # [G, 1, HM]

    q_prime = ratio * (jnp.exp(qd - diag_q - q_stab) + FAVOR_EPS)              # [GN, HM]
    k_prime3 = ratio * (jnp.exp(kd3 - diag_k.reshape(G, N, HM) - k_stab)
                        + FAVOR_EPS)                                           # [G, N, HM]
    qp3 = q_prime.reshape(G, N, HM)
    v3 = v.reshape(G, N, D)

    # k_sum per (graph, head-feature) via a batched ones-matmul.
    ones_n = jnp.ones((G, 1, N), jnp.float32)
    k_sum = jnp.einsum('gon,gnf->gof', ones_n, k_prime3,
                       preferred_element_type=jnp.float32)                     # [G, 1, HM]

    # Context and numerator for all (graph, head) pairs in two batched dots;
    # cross-head blocks are masked out of the context.
    blk_r = lax.broadcasted_iota(jnp.int32, (HM, D), 0) // M
    blk_c = lax.broadcasted_iota(jnp.int32, (HM, D), 1) // DH
    blkmask = (blk_r == blk_c).astype(jnp.float32)                             # [HM, D]
    ctx = jnp.einsum('gnf,gne->gfe', k_prime3, v3,
                     preferred_element_type=jnp.float32)                       # [G, HM, D]
    ctx = ctx * blkmask[None, :, :]
    num = jnp.einsum('gnf,gfe->gne', qp3, ctx,
                     preferred_element_type=jnp.float32)                       # [G, N, D]

    # Denominator, broadcast to each head's DH output columns via the same indicator matmul.
    t = (qp3 * k_sum).reshape(GN, HM)
    denom = jnp.dot(t, blkmask, preferred_element_type=jnp.float32)            # [GN, D]

    attn = num.reshape(GN, D) * pl.reciprocal(denom, approx=True)              # [GN, D]
    out = jnp.dot(attn, wo_ref[...],
                  preferred_element_type=jnp.float32) + bo_ref[...]
    o_ref[...] = out.reshape(G, N, D)


def _add3_moments_kernel(a_ref, b_ref, c_ref, s_ref, mom_ref, *, n_valid, row_tile):
    # Row-tiled s = a + b + c plus masked BN moments of s (padded rows excluded).
    @pl.when(pl.program_id(0) == 0)
    def _():
        mom_ref[...] = jnp.zeros_like(mom_ref)

    s = a_ref[...] + b_ref[...] + c_ref[...]
    s_ref[...] = s
    rows = pl.program_id(0) * row_tile + lax.broadcasted_iota(jnp.int32, (row_tile, 1), 0)
    sm = jnp.where(rows < n_valid, s, 0.0)
    mom_ref[...] += jnp.concatenate(
        [jnp.sum(sm, axis=0, keepdims=True),
         jnp.sum(sm * sm, axis=0, keepdims=True)], axis=0)


def _affine_kernel(s_ref, scale_ref, shift_ref, o_ref):
    o_ref[...] = s_ref[...] * scale_ref[...] + shift_ref[...]


# ----------------------------- pallas_call wrappers -----------------------------

def compute_moments(x_pad, row_tile):
    n_pad, d = x_pad.shape
    return pl.pallas_call(
        _moments_kernel,
        out_shape=jax.ShapeDtypeStruct((2, d), jnp.float32),
        grid_spec=pltpu.PrefetchScalarGridSpec(
            num_scalar_prefetch=0, grid=(n_pad // row_tile,),
            in_specs=[pl.BlockSpec((row_tile, d), lambda i: (i, 0))],
            out_specs=pl.BlockSpec((2, d), lambda i: (0, 0))),
        compiler_params=pltpu.CompilerParams(dimension_semantics=("arbitrary",)),
    )(x_pad)


def bn_affine_matmul(x_pad, scale, shift, w, row_tile):
    n_pad, d = x_pad.shape
    return pl.pallas_call(
        _bn_affine_matmul_kernel,
        out_shape=jax.ShapeDtypeStruct((n_pad, w.shape[1]), jnp.bfloat16),
        grid_spec=pltpu.PrefetchScalarGridSpec(
            num_scalar_prefetch=0, grid=(n_pad // row_tile,),
            in_specs=[pl.BlockSpec((row_tile, d), lambda i: (i, 0)),
                      pl.BlockSpec((1, d), lambda i: (0, 0)),
                      pl.BlockSpec((1, d), lambda i: (0, 0)),
                      pl.BlockSpec((d, w.shape[1]), lambda i: (0, 0))],
            out_specs=pl.BlockSpec((row_tile, w.shape[1]), lambda i: (i, 0))),
        compiler_params=pltpu.CompilerParams(dimension_semantics=("parallel",)),
    )(x_pad, scale, shift, w)


def gcn_aggregate(a_hat_pad, xw_pad, bias, *, max_tile=1024):
    # relu(A_hat @ XW + b); A_hat already padded to [n_pad, n_pad] bf16 outside the forward path.
    n_pad, d = xw_pad.shape
    tile = _pick_tile(n_pad, max_tile)
    grid = (n_pad // tile, n_pad // tile)
    return pl.pallas_call(
        _gcn_agg_kernel,
        out_shape=jax.ShapeDtypeStruct((n_pad, d), jnp.float32),
        grid_spec=pltpu.PrefetchScalarGridSpec(
            num_scalar_prefetch=0, grid=grid,
            in_specs=[pl.BlockSpec((tile, tile), lambda i, k: (i, k)),
                      pl.BlockSpec((tile, d), lambda i, k: (k, 0)),
                      pl.BlockSpec((1, d), lambda i, k: (0, 0))],
            out_specs=pl.BlockSpec((tile, d), lambda i, k: (i, 0)),
            scratch_shapes=[pltpu.VMEM((tile, d), jnp.float32)]),
        compiler_params=pltpu.CompilerParams(
            dimension_semantics=("parallel", "arbitrary"),
            vmem_limit_bytes=32 * 1024 * 1024),
    )(a_hat_pad, xw_pad, bias.reshape(1, d))


def performer_attention(h_dense, lengths, w_qkv, b_qkv, proj_bd, wo, bo, *, gblk):
    b_pad, nmax, d = h_dense.shape
    d3 = w_qkv.shape[1]
    hm = proj_bd.shape[1]
    kern = functools.partial(_performer_kernel, gblk=gblk, nmax=nmax)
    return pl.pallas_call(
        kern,
        out_shape=jax.ShapeDtypeStruct((b_pad, nmax, d), jnp.float32),
        grid_spec=pltpu.PrefetchScalarGridSpec(
            num_scalar_prefetch=1,                 # per-graph node counts -> SMEM
            grid=(b_pad // gblk,),
            in_specs=[pl.BlockSpec((gblk, nmax, d), lambda i, lens: (i, 0, 0)),
                      pl.BlockSpec((d, d3), lambda i, lens: (0, 0)),
                      pl.BlockSpec((1, d3), lambda i, lens: (0, 0)),
                      pl.BlockSpec((d, hm), lambda i, lens: (0, 0)),
                      pl.BlockSpec((d, d), lambda i, lens: (0, 0)),
                      pl.BlockSpec((1, d), lambda i, lens: (0, 0))],
            out_specs=pl.BlockSpec((gblk, nmax, d), lambda i, lens: (i, 0, 0))),
        compiler_params=pltpu.CompilerParams(dimension_semantics=("parallel",)),
    )(lengths, h_dense, w_qkv, b_qkv.reshape(1, d3), proj_bd, wo, bo.reshape(1, d))


def add3_with_moments(a, b, c, n_valid, row_tile):
    n_pad, d = a.shape
    kern = functools.partial(_add3_moments_kernel, n_valid=n_valid, row_tile=row_tile)
    return pl.pallas_call(
        kern,
        out_shape=(jax.ShapeDtypeStruct((n_pad, d), jnp.float32),
                   jax.ShapeDtypeStruct((2, d), jnp.float32)),
        grid_spec=pltpu.PrefetchScalarGridSpec(
            num_scalar_prefetch=0, grid=(n_pad // row_tile,),
            in_specs=[pl.BlockSpec((row_tile, d), lambda i: (i, 0)),
                      pl.BlockSpec((row_tile, d), lambda i: (i, 0)),
                      pl.BlockSpec((row_tile, d), lambda i: (i, 0))],
            out_specs=[pl.BlockSpec((row_tile, d), lambda i: (i, 0)),
                       pl.BlockSpec((2, d), lambda i: (0, 0))]),
        compiler_params=pltpu.CompilerParams(dimension_semantics=("arbitrary",)),
    )(a, b, c)


def affine_norm(s, scale, shift, row_tile):
    n_pad, d = s.shape
    return pl.pallas_call(
        _affine_kernel,
        out_shape=jax.ShapeDtypeStruct((n_pad, d), jnp.float32),
        grid_spec=pltpu.PrefetchScalarGridSpec(
            num_scalar_prefetch=0, grid=(n_pad // row_tile,),
            in_specs=[pl.BlockSpec((row_tile, d), lambda i: (i, 0)),
                      pl.BlockSpec((1, d), lambda i: (0, 0)),
                      pl.BlockSpec((1, d), lambda i: (0, 0))],
            out_specs=pl.BlockSpec((row_tile, d), lambda i: (i, 0))),
        compiler_params=pltpu.CompilerParams(dimension_semantics=("parallel",)),
    )(s, scale, shift)


# ----------------------------- glue -----------------------------

def _bn_scale_shift(mom, n, gamma, beta):
    mean = mom[0] / n
    var = mom[1] / n - mean * mean          # biased (training-mode) variance
    scale = gamma * lax.rsqrt(var + BN_EPS)
    shift = beta - mean * scale
    return scale.reshape(1, -1), shift.reshape(1, -1)


def to_dense_batch(h, batch_vec, pos, num_graphs_pad, nmax_pad):
    # TODO(synk): sparse-node <-> dense-batch scatter/gather is left to XLA; a Pallas DMA
    #             gather adds complexity for little gain at [N, 32] sizes.
    d = h.shape[1]
    return jnp.zeros((num_graphs_pad, nmax_pad, d), h.dtype).at[batch_vec, pos].set(h)


def prepare_adjacency(a_hat, n_pad):
    # Hoisted out of the per-forward path: pad + cast the dense A_hat once.
    n = a_hat.shape[0]
    return jnp.zeros((n_pad, n_pad), jnp.bfloat16).at[:n, :n].set(a_hat.astype(jnp.bfloat16))


def performer_wrapper_forward(params, x, a_hat_pad, batch_vec, pos, num_graphs, max_nodes):
    n, d = x.shape
    n_pad = a_hat_pad.shape[0]
    row_tile = _pick_tile(n_pad, 1024)

    h = x
    x_pad = jnp.zeros((n_pad, d), jnp.float32).at[:n].set(x)

    # norm1 (batch stats) + identity dropout folded into the GCN feature transform, row-tiled.
    mom1 = compute_moments(x_pad, row_tile)
    scale1, shift1 = _bn_scale_shift(mom1, n, params["bn1_gamma"], params["bn1_beta"])
    xw = bn_affine_matmul(x_pad, scale1, shift1, params["conv_w"], row_tile)   # bf16 [n_pad, d]

    # conv_layer: GCN-style dense aggregation relu(A_hat @ XW + b).
    # TODO(synk): conv_layer is an injected module in the original; a GCN-style conv is used here.
    conv_out = gcn_aggregate(a_hat_pad, xw, params["conv_b"])                  # f32 [n_pad, d]

    # Performer self-attention on the original features h, densely batched per graph.
    gblk = _pick_graph_block(num_graphs)
    b_pad = _round_up(num_graphs, gblk)
    nmax_pad = _round_up(max(max_nodes, 1), 8)
    h_dense = to_dense_batch(h, batch_vec, pos, b_pad, nmax_pad)
    lengths = jnp.zeros((b_pad,), jnp.int32).at[batch_vec].add(1)
    proj_bd = jnp.kron(jnp.eye(NUM_HEADS, dtype=jnp.float32), params["proj_t"])  # [d, H*M]
    attn_dense = performer_attention(
        h_dense, lengths, params["w_qkv"], params["b_qkv"], proj_bd,
        params["wo"], params["bo"], gblk=gblk)                                 # [b_pad, nmax, d]

    bv_pad = jnp.zeros((n_pad,), jnp.int32).at[:n].set(batch_vec)
    pos_pad = jnp.zeros((n_pad,), jnp.int32).at[:n].set(pos)
    h_attn = attn_dense[bv_pad, pos_pad]                                       # [n_pad, d]

    # norm2(conv_out + h_attn + h): fused add + masked moments, then normalize.
    s, mom2 = add3_with_moments(conv_out, h_attn, x_pad, n, row_tile)
    scale2, shift2 = _bn_scale_shift(mom2, n, params["bn2_gamma"], params["bn2_beta"])
    out_pad = affine_norm(s, scale2, shift2, row_tile)
    return out_pad[:n]


# ----------------------------- parameter / data construction -----------------------------

def init_params(key):
    ks = jax.random.split(key, 8)

    def w(k, fan_in, fan_out):
        return jax.random.normal(k, (fan_in, fan_out), jnp.float32) / np.sqrt(fan_in)

    return {
        "bn1_gamma": jnp.ones((DIM_H,), jnp.float32),
        "bn1_beta": jnp.zeros((DIM_H,), jnp.float32),
        "bn2_gamma": jnp.ones((DIM_H,), jnp.float32),
        "bn2_beta": jnp.zeros((DIM_H,), jnp.float32),
        "conv_w": w(ks[0], DIM_H, DIM_H),
        "conv_b": jnp.zeros((DIM_H,), jnp.float32),
        # Q|K|V projections fused into one [D, 3D] weight / [3D] bias.
        "w_qkv": jnp.concatenate(
            [w(ks[1], DIM_H, DIM_H), w(ks[2], DIM_H, DIM_H), w(ks[3], DIM_H, DIM_H)], axis=1),
        "b_qkv": jnp.zeros((3 * DIM_H,), jnp.float32),
        "wo": w(ks[4], DIM_H, DIM_H),
        "bo": jnp.zeros((DIM_H,), jnp.float32),
        # TODO(synk): plain Gaussian random-feature projection (not block-orthogonalized).
        "proj_t": jax.random.normal(ks[5], (DIM_HEAD, NB_FEATURES), jnp.float32),
    }


def build_graph(sizes):
    n_total = int(sum(sizes))
    batch_vec = np.concatenate([np.full(s, g, np.int32) for g, s in enumerate(sizes)])
    offsets = np.cumsum([0] + list(sizes[:-1]))
    pos = np.arange(n_total, dtype=np.int32) - offsets[batch_vec]
    # ring graph within each component, plus self loops, symmetric normalization
    a = np.eye(n_total, dtype=np.float32)
    for g, s in enumerate(sizes):
        off = int(offsets[g])
        for i in range(s):
            j = (i + 1) % s
            a[off + i, off + j] = 1.0
            a[off + j, off + i] = 1.0
    deg = a.sum(axis=1)
    dinv = 1.0 / np.sqrt(deg)
    a_hat = (a * dinv[:, None]) * dinv[None, :]
    return (jnp.asarray(batch_vec), jnp.asarray(pos),
            jnp.asarray(a_hat, jnp.float32), len(sizes), int(max(sizes)))


if __name__ == "__main__":
    key = jax.random.PRNGKey(0)
    k_param, k_x = jax.random.split(key)

    sizes = [5, 8]                        # two graphs, 13 nodes total, Nmax = 8
    batch_vec, pos, a_hat, num_graphs, max_nodes = build_graph(sizes)
    n_total = int(batch_vec.shape[0])

    # A_hat pad + bf16 cast hoisted out of the forward path (done once per graph).
    n_pad = _round_up(n_total, 128)
    a_hat_pad = prepare_adjacency(a_hat, n_pad)

    params = init_params(k_param)
    x = jax.random.normal(k_x, (n_total, DIM_H), jnp.float32)

    out = performer_wrapper_forward(params, x, a_hat_pad, batch_vec, pos, num_graphs, max_nodes)
    out = jax.block_until_ready(out)
    assert out.shape == (n_total, DIM_H)
    assert bool(jnp.all(jnp.isfinite(out)))
    print("KERNEL_OK")
</pallas_src>

<mosaic_0001>
module attributes {stable_mosaic.version = 11 : i64} {
  func.func @_moments_kernel(%arg0: i32, %arg1: memref<128x32xf32, #tpu.memory_space<vmem>>, %arg2: memref<2x32xf32, #tpu.memory_space<vmem>>) attributes {dimension_semantics = [#tpu.dimension_semantics<arbitrary>], iteration_bounds = array<i64: 1>, scalar_prefetch = 0 : i64, scratch_operands = 0 : i64, tpu.core_type = #tpu.core_type<tc>, window_params = [{transform_indices = @transform_0, window_bounds = array<i64: 128, 32>}, {pipeline_mode = #tpu.pipeline_mode<synchronous>, transform_indices = @transform_1, window_bounds = array<i64: 2, 32>}]} {
    %c0_i32 = arith.constant 0 : i32
    %0 = arith.cmpi eq, %arg0, %c0_i32 : i32
    %1 = arith.extui %0 : i1 to i32
    %c0_i32_0 = arith.constant 0 : i32
    %2 = arith.cmpi ne, %1, %c0_i32_0 : i32
    scf.if %2 {
      %cst_7 = arith.constant 0.000000e+00 : f32
      %13 = vector.broadcast %cst_7 : f32 to vector<2x32xf32>
      %c0_8 = arith.constant 0 : index
      %c0_9 = arith.constant 0 : index
      %14 = vector.load %arg2[%c0_8, %c0_9] : memref<2x32xf32, #tpu.memory_space<vmem>>, vector<2x32xf32>
      tpu.vector_store %arg2[%c0_8, %c0_9], %13 {strides = array<i32>} : memref<2x32xf32, #tpu.memory_space<vmem>>, vector<2x32xf32>,
    } else {
    }
    %c0 = arith.constant 0 : index
    %c0_1 = arith.constant 0 : index
    %3 = vector.load %arg1[%c0, %c0_1] : memref<128x32xf32, #tpu.memory_space<vmem>>, vector<128x32xf32>
    %c0_2 = arith.constant 0 : index
    %c0_3 = arith.constant 0 : index
    %4 = vector.load %arg2[%c0_2, %c0_3] : memref<2x32xf32, #tpu.memory_space<vmem>>, vector<2x32xf32>
    %cst = arith.constant dense<0.000000e+00> : vector<32xf32>
    %5 = vector.multi_reduction <add>, %3, %cst [0] : vector<128x32xf32> to vector<32xf32>
    %6 = vector.shape_cast %5 : vector<32xf32> to vector<1x32xf32>
    %7 = arith.mulf %3, %3 : vector<128x32xf32>
    %cst_4 = arith.constant dense<0.000000e+00> : vector<32xf32>
    %8 = vector.multi_reduction <add>, %7, %cst_4 [0] : vector<128x32xf32> to vector<32xf32>
    %9 = vector.shape_cast %8 : vector<32xf32> to vector<1x32xf32>
    %10 = tpu.concatenate %6, %9 in 0 : vector<1x32xf32>, vector<1x32xf32> -> vector<2x32xf32>
    %11 = arith.addf %4, %10 : vector<2x32xf32>
    %c0_5 = arith.constant 0 : index
    %c0_6 = arith.constant 0 : index
    %12 = vector.load %arg2[%c0_5, %c0_6] : memref<2x32xf32, #tpu.memory_space<vmem>>, vector<2x32xf32>
    tpu.vector_store %arg2[%c0_5, %c0_6], %11 {strides = array<i32>} : memref<2x32xf32, #tpu.memory_space<vmem>>, vector<2x32xf32>,
    return
  }
  func.func @transform_0(%arg0: i32) -> (i32, i32) {
    %c0_i32 = arith.constant 0 : i32
    %c0_i32_0 = arith.constant 0 : i32
    return %arg0, %c0_i32 : i32, i32
  }
  func.func @transform_1(%arg0: i32) -> (i32, i32) {
    %c0_i32 = arith.constant 0 : i32
    %c0_i32_0 = arith.constant 0 : i32
    %c0_i32_1 = arith.constant 0 : i32
    return %c0_i32, %c0_i32_0 : i32, i32
  }
}

</mosaic_0001>

<llo_original>
// kernel: tpu_custom_call.1
$region0: #{tpu_custom_call.1}
  #allocation0 [shape = 'u32[]', space=smem, size = 0x4, offset = 0x4, fixed_abs, tag = 'smem constant byte address 0x4 - core index']
  #allocation1 [shape = 'u32[144,128]{1,0:T(1,128)}', space=vmem, size = 0x12000, scoped, tag = 'internal scratch']
  %s0 = inlined_call_operand.vmem [shape: f32[128,32], index: 0, kind: input, shape index: {}]
  %s1 = inlined_call_operand.hbm [shape: f32[2,32], index: 1, kind: output, shape index: {}]
  %s2 = sld [smem:[#allocation0]]
  $region18: #{tpu_custom_call.1} parent=0
    _
  %s4 = ssub.s32 1, %s2
  %s5 = scalar_select 0, %s4, %s2
  $region1: #{tpu_custom_call.1} parent=0
    #allocation2 [shape = 'u8[1024]{0}', space=vmem, size = 0x400, scoped, tag = 'output window, operand 0, single buffered']
    #allocation3 [shape = 's32[1]{0}', space=sflag, size = 0x4, scoped, tag = 'scoped memory for tpu_custom_call.1']
    %6 = vsyncpa [#allocation3], 0
    // Predicated region
    $region2: #{tpu_custom_call.1} parent=1 // pred_check
      _
    $region3: #{tpu_custom_call.1} parent=1 // pred_check_branch
      %8 = sbr.rel (0) target = $region5
    $region4: #{tpu_custom_call.1} parent=1 // pred_region
      _
    $region5: #{tpu_custom_call.1} parent=1 // pred_fallthru
      _
    %p9 = scmp.eq.s32.totalorder 0, 0
    // Predicated region
    $region6: #{tpu_custom_call.1} parent=1 // pred_check
      %p10 = pneg %p9
    $region7: #{tpu_custom_call.1} parent=1 // pred_check_branch
      %12 = sbr.rel (%p10) target = $region9
    $region8: #{tpu_custom_call.1} parent=1 // pred_region
      %vm13 = vcmask 254976
      %14 = vst.msk [vmem:[#allocation2] sm:$0x3] %vm13, 0.0
    $region9: #{tpu_custom_call.1} parent=1 // pred_fallthru
      _
    %v15 = vld [vmem:[%s0] sm:$0xff]
    %v16 = vld [vmem:[%s0 + $0x8] sm:$0xff]
    %v17 = vld [vmem:[%s0 + $0x10] sm:$0xff]
    %v18 = vld [vmem:[%s0 + $0x18] sm:$0xff]
    %v19 = vld [vmem:[%s0 + $0x20] sm:$0xff]
    %v20 = vld [vmem:[%s0 + $0x28] sm:$0xff]
    %v21 = vld [vmem:[%s0 + $0x30] sm:$0xff]
    %v22 = vld [vmem:[%s0 + $0x38] sm:$0xff]
    %v23 = vld [vmem:[%s0 + $0x40] sm:$0xff]
    %v24 = vld [vmem:[%s0 + $0x48] sm:$0xff]
    %v25 = vld [vmem:[%s0 + $0x50] sm:$0xff]
    %v26 = vld [vmem:[%s0 + $0x58] sm:$0xff]
    %v27 = vld [vmem:[%s0 + $0x60] sm:$0xff]
    %v28 = vld [vmem:[%s0 + $0x68] sm:$0xff]
    %v29 = vld [vmem:[%s0 + $0x70] sm:$0xff]
    %v30 = vld [vmem:[%s0 + $0x78] sm:$0xff]
    %v31 = vld [vmem:[#allocation2] sm:$0x3]
    %vm32 = vcmask 261120
    %v33 = vsel %vm32, %v15, 0.0
    %v34 = vsel %vm32, %v16, 0.0
    %v35 = vadd.f32 %v33, %v34
    %v36 = vsel %vm32, %v17, 0.0
    %v37 = vadd.f32 %v35, %v36
    %v38 = vsel %vm32, %v18, 0.0
    %v39 = vadd.f32 %v37, %v38
    %v40 = vsel %vm32, %v19, 0.0
    %v41 = vadd.f32 %v39, %v40
    %v42 = vsel %vm32, %v20, 0.0
    %v43 = vadd.f32 %v41, %v42
    %v44 = vsel %vm32, %v21, 0.0
    %v45 = vadd.f32 %v43, %v44
    %v46 = vsel %vm32, %v22, 0.0
    %v47 = vadd.f32 %v45, %v46
    %v48 = vsel %vm32, %v23, 0.0
    %v49 = vadd.f32 %v47, %v48
    %v50 = vsel %vm32, %v24, 0.0
    %v51 = vadd.f32 %v49, %v50
    %v52 = vsel %vm32, %v25, 0.0
    %v53 = vadd.f32 %v51, %v52
    %v54 = vsel %vm32, %v26, 0.0
    %v55 = vadd.f32 %v53, %v54
    %v56 = vsel %vm32, %v27, 0.0
    %v57 = vadd.f32 %v55, %v56
    %v58 = vsel %vm32, %v28, 0.0
    %v59 = vadd.f32 %v57, %v58
    %v60 = vsel %vm32, %v29, 0.0
    %v61 = vadd.f32 %v59, %v60
    %v62 = vsel %vm32, %v30, 0.0
    %v63 = vadd.f32 %v61, %v62
    %v64 = vrot.slane %v63, 4
    %v65 = vadd.f32 %v63, %v64
    %v66 = vrot.slane %v65, 2
    %v67 = vadd.f32 %v65, %v66
    %v68 = vrot.slane %v67, 1
    %v69 = vadd.f32 %v67, %v68
    %v70 = vmul.f32 %v15, %v15
    %v71 = vmul.f32 %v16, %v16
    %v72 = vmul.f32 %v17, %v17
    %v73 = vmul.f32 %v18, %v18
    %v74 = vmul.f32 %v19, %v19
    %v75 = vmul.f32 %v20, %v20
    %v76 = vmul.f32 %v21, %v21
    %v77 = vmul.f32 %v22, %v22
    %v78 = vmul.f32 %v23, %v23
    %v79 = vmul.f32 %v24, %v24
    %v80 = vmul.f32 %v25, %v25
    %v81 = vmul.f32 %v26, %v26
    %v82 = vmul.f32 %v27, %v27
    %v83 = vmul.f32 %v28, %v28
    %v84 = vmul.f32 %v29, %v29
    %v85 = vmul.f32 %v30, %v30
    %v86 = vsel %vm32, %v70, 0.0
    %v87 = vsel %vm32, %v71, 0.0
    %v88 = vadd.f32 %v86, %v87
    %v89 = vsel %vm32, %v72, 0.0
    %v90 = vadd.f32 %v88, %v89
    %v91 = vsel %vm32, %v73, 0.0
    %v92 = vadd.f32 %v90, %v91
    %v93 = vsel %vm32, %v74, 0.0
    %v94 = vadd.f32 %v92, %v93
    %v95 = vsel %vm32, %v75, 0.0
    %v96 = vadd.f32 %v94, %v95
    %v97 = vsel %vm32, %v76, 0.0
    %v98 = vadd.f32 %v96, %v97
    %v99 = vsel %vm32, %v77, 0.0
    %v100 = vadd.f32 %v98, %v99
    %v101 = vsel %vm32, %v78, 0.0
    %v102 = vadd.f32 %v100, %v101
    %v103 = vsel %vm32, %v79, 0.0
    %v104 = vadd.f32 %v102, %v103
    %v105 = vsel %vm32, %v80, 0.0
    %v106 = vadd.f32 %v104, %v105
    %v107 = vsel %vm32, %v81, 0.0
    %v108 = vadd.f32 %v106, %v107
    %v109 = vsel %vm32, %v82, 0.0
    %v110 = vadd.f32 %v108, %v109
    %v111 = vsel %vm32, %v83, 0.0
    %v112 = vadd.f32 %v110, %v111
    %v113 = vsel %vm32, %v84, 0.0
    %v114 = vadd.f32 %v112, %v113
    %v115 = vsel %vm32, %v85, 0.0
    %v116 = vadd.f32 %v114, %v115
    %v117 = vrot.slane %v116, 4
    %v118 = vadd.f32 %v116, %v117
    %v119 = vrot.slane %v118, 2
    %v120 = vadd.f32 %v118, %v119
    %v121 = vrot.slane %v120, 1
    %v122 = vadd.f32 %v120, %v121
    %vm123 = vcmask 1040384
    %v124 = vsel %vm123, %v69, %v122
    %v125 = vadd.f32 %v31, %v124
    %vm126 = vcmask 254976
    %127 = vst.msk [vmem:[#allocation2] sm:$0x3] %vm126, %v125
    // Predicated region
    $region10: #{tpu_custom_call.1} parent=1 // pred_check
      _
    $region11: #{tpu_custom_call.1} parent=1 // pred_check_branch
      %129 = sbr.rel (0) target = $region13
    $region12: #{tpu_custom_call.1} parent=1 // pred_region
      %s131 = ssub.s32 32, 32
      %132 = vsyncadd [#allocation3], %s131
      %s134 = sshll.u32 [#allocation2], 4
      %s135 = int_to_ptr.vmem [resolvable:$true] %s134
      %137 = dma.vmem_to_hbm [thread:$0]  %s135, 32, %s1, [#allocation3]
    $region13: #{tpu_custom_call.1} parent=1 // pred_fallthru
      _
    // Predicated region
    $region14: #{tpu_custom_call.1} parent=1 // pred_check
      _
    $region15: #{tpu_custom_call.1} parent=1 // pred_check_branch
      %139 = sbr.rel (0) target = $region17
    $region16: #{tpu_custom_call.1} parent=1 // pred_region
      %140 = dma.done [#allocation3], 32
    $region17: #{tpu_custom_call.1} parent=1 // pred_fallthru
      _
    %141 = vsyncpa [#allocation3], 1

</llo_original>
